<compile_context>
chip_gen: v5e
topology: v5e:2x2
jax: 0.10.0
libtpu: 0.0.40
codegen_flags: <defaults>
</compile_context>

<pallas_src>
import functools

import jax
import jax.numpy as jnp
import numpy as np
from jax.experimental import pallas as pl
from jax.experimental.pallas import tpu as pltpu


_BLOCK_TARGET_BYTES = 4 * 1024 * 1024   # target size of ONE input block (output block is equal)
_FOOTPRINT_CAP = 26 * 1024 * 1024       # give up (XLA fallback) past this live-VMEM estimate
_VMEM_LIMIT_CAP = 30 * 1024 * 1024      # stay under v7x's 32 MiB scoped-VMEM default


def _sublane_multiple(dtype):
    # native sublane packing: 8 rows for 4-byte, 16 for 2-byte dtypes
    return max(8, 32 // jnp.dtype(dtype).itemsize)


def _pick_th(H, row_bytes, sub, budget=_BLOCK_TARGET_BYTES):
    """Largest multiple of `sub` dividing H whose block stays under `budget` bytes."""
    if H % sub != 0:
        return None
    best = sub
    for t in range(sub, H + 1, sub):
        if H % t == 0 and t * row_bytes <= budget:
            best = t
    return best


def _one_hot_tables(tW, bs):
    """(bs, tW, tW*bs) bf16 one-hot interleave tables: P[b2, w, w*bs + b2] = 1."""
    w = jnp.arange(tW, dtype=jnp.int32)
    return jnp.stack(
        [jax.nn.one_hot(w * bs + b2, tW * bs, dtype=jnp.bfloat16) for b2 in range(bs)],
        axis=0)


def _interleave_dot(xs, p_b2):
    """Permute xs (M, K) into interleaved lanes (M, K*bs) via one-hot table p_b2 (K, K*bs).

    bf16 data -> single native MXU pass (exact: one-hot weights, f32 accumulation).
    f32 data  -> exact 3-way bf16 split of the data (hi/mid/lo), 3 bf16 MXU passes.
                 Avoids the default-precision bf16 rounding of f32 operands and is ~2x
                 cheaper than precision=HIGHEST's 6-pass emulation, so K=128 stays
                 HBM-bound even on v5e.
    """
    if xs.dtype == jnp.float32:
        hi = xs.astype(jnp.bfloat16)
        r1 = xs - hi.astype(jnp.float32)
        mid = r1.astype(jnp.bfloat16)
        lo = (r1 - mid.astype(jnp.float32)).astype(jnp.bfloat16)
        acc = jnp.dot(hi, p_b2, preferred_element_type=jnp.float32)
        acc = acc + jnp.dot(mid, p_b2, preferred_element_type=jnp.float32)
        acc = acc + jnp.dot(lo, p_b2, preferred_element_type=jnp.float32)
        return acc
    return jnp.dot(xs, p_b2, preferred_element_type=jnp.float32)


# ------------------------------------------------------------------ chunked (W % 128 == 0)
def _d2s_chunked_kernel(p_ref, x_ref, o_ref, *, bs, c_out):
    """One (n, b1, h-tile, w-chunk) step.

    p_ref: (bs, tW, tW*bs) bf16 one-hot tables
    x_ref: (1, bs*c_out, tH, tW)   channel group b1, lane chunk w of the NCHW input
    o_ref: (1, c_out, tH, tW*bs)   lane-dense output chunk (trailing dim % 128 == 0)

    o[0, c, t, w*bs + b2] = x[0, b2*c_out + c, t, w]
    """
    tH, tW = x_ref.shape[2], x_ref.shape[3]
    acc = jnp.zeros((c_out * tH, tW * bs), jnp.float32)
    for b2 in range(bs):                              # tiny static unroll (bs <= 4)
        xs = x_ref[0, pl.ds(b2 * c_out, c_out), :, :].reshape(c_out * tH, tW)
        acc = acc + _interleave_dot(xs, p_ref[b2])
    o_ref[0] = acc.reshape(c_out, tH, tW * bs).astype(o_ref.dtype)


def _depth_to_space_chunked(x, bs, c_out):
    """W % 128 == 0: grid-chunked, lane-dense path (output block trailing dim = 128*bs)."""
    N, C, H, W = x.shape
    dt = x.dtype
    isz = dt.itemsize
    tW = 128                     # smallest chunk the (8,128) input-block rule allows -> K = 128
    nw = W // tW
    sub = _sublane_multiple(dt)
    row_bytes = bs * c_out * tW * isz
    tH = _pick_th(H, row_bytes, sub)
    if tH is None:
        return None

    p = _one_hot_tables(tW, bs)
    block_bytes = row_bytes * tH                        # input block == output block size
    footprint = 4 * block_bytes + 2 * p.size * 2        # double-buffered in+out, p (bf16)
    if footprint > _FOOTPRINT_CAP:
        return None
    need = footprint + 4 * 1024 * 1024
    vmem_limit = None if need <= 16 * 1024 * 1024 else min(_VMEM_LIMIT_CAP, need)

    def p_map(n, b1, h, w):
        return (0, 0, 0)

    def x_map(n, b1, h, w):
        return (n, b1, h, w)

    def o_map(n, b1, h, w):
        return (n, 0, h, b1 * nw + w)

    kernel = functools.partial(_d2s_chunked_kernel, bs=bs, c_out=c_out)
    out4 = pl.pallas_call(
        kernel,
        out_shape=jax.ShapeDtypeStruct((N, c_out, H, bs * bs * W), dt),
        grid=(N, bs, H // tH, nw),
        in_specs=[
            pl.BlockSpec((bs, tW, tW * bs), p_map),
            pl.BlockSpec((1, bs * c_out, tH, tW), x_map),
        ],
        out_specs=pl.BlockSpec((1, c_out, tH, tW * bs), o_map),
        compiler_params=pltpu.CompilerParams(
            dimension_semantics=("parallel", "parallel", "parallel", "parallel"),
            vmem_limit_bytes=vmem_limit),
        cost_estimate=pl.CostEstimate(          # memory-bound: advisory flops kept at 0
            flops=0, transcendentals=0,
            bytes_accessed=2 * x.size * isz + p.size * 2),
    )(p, x)
    # row-major merge of (H, bs) -> H*bs: free reshape, no data movement
    return out4.reshape(N, c_out, H * bs, W * bs)


# ------------------------------------------------------- full-width (small / irregular W)
def _d2s_fullwidth_kernel(p_ref, x_ref, o_ref, *, bs, c_out):
    """One (n, h-tile) step with b1 folded into the kernel.

    p_ref: (bs, W, W*bs) bf16
    x_ref: (1, C, tH, W)              full channel dim, full width
    o_ref: (1, c_out, tH, bs*bs*W)    full interleaved width (== array dim, any W legal)

    o[0, c, t, b1*bs*W + w*bs + b2] = x[0, (b1*bs + b2)*c_out + c, t, w]
    """
    tH, W = x_ref.shape[2], x_ref.shape[3]
    for b1 in range(bs):
        acc = jnp.zeros((c_out * tH, W * bs), jnp.float32)
        for b2 in range(bs):
            c0 = (b1 * bs + b2) * c_out
            xs = x_ref[0, pl.ds(c0, c_out), :, :].reshape(c_out * tH, W)
            acc = acc + _interleave_dot(xs, p_ref[b2])
        # static lane offset; masked edge store only when (bs*W) % 128 != 0
        o_ref[0, :, :, pl.ds(b1 * bs * W, bs * W)] = (
            acc.reshape(c_out, tH, bs * W).astype(o_ref.dtype))


def _depth_to_space_fullwidth(x, bs, c_out):
    """Any W with W*bs <= 512: single-pass NCHW path for widths the chunked path can't tile."""
    N, C, H, W = x.shape
    dt = x.dtype
    isz = dt.itemsize
    sub = _sublane_multiple(dt)
    row_bytes = C * W * isz
    tH = _pick_th(H, row_bytes, sub)
    if tH is None:
        return None

    p = _one_hot_tables(W, bs)
    block_bytes = row_bytes * tH
    footprint = 4 * block_bytes + 2 * p.size * 2
    if footprint > _FOOTPRINT_CAP:
        return None
    need = footprint + 4 * 1024 * 1024
    vmem_limit = None if need <= 16 * 1024 * 1024 else min(_VMEM_LIMIT_CAP, need)

    def p_map(n, h):
        return (0, 0, 0)

    def x_map(n, h):
        return (n, 0, h, 0)

    def o_map(n, h):
        return (n, 0, h, 0)

    kernel = functools.partial(_d2s_fullwidth_kernel, bs=bs, c_out=c_out)
    out4 = pl.pallas_call(
        kernel,
        out_shape=jax.ShapeDtypeStruct((N, c_out, H, bs * bs * W), dt),
        grid=(N, H // tH),
        in_specs=[
            pl.BlockSpec((bs, W, W * bs), p_map),
            pl.BlockSpec((1, C, tH, W), x_map),
        ],
        out_specs=pl.BlockSpec((1, c_out, tH, bs * bs * W), o_map),
        compiler_params=pltpu.CompilerParams(
            dimension_semantics=("parallel", "parallel"),
            vmem_limit_bytes=vmem_limit),
        cost_estimate=pl.CostEstimate(
            flops=0, transcendentals=0,
            bytes_accessed=2 * x.size * isz + p.size * 2),
    )(p, x)
    return out4.reshape(N, c_out, H * bs, W * bs)


# ---------------------------------------------------------------------------------- public
def depth_to_space_ref(x, bs):
    """Pure-JAX replica of the torch forward (verification / last-resort fallback)."""
    N, C, H, W = x.shape
    x = x.reshape(N, bs, bs, C // bs ** 2, H, W)
    x = jnp.transpose(x, (0, 3, 4, 1, 5, 2))
    return x.reshape(N, C // bs ** 2, H * bs, W * bs)


def depth_to_space(x, block_size):
    """Pallas TPU implementation of the PyTorch DepthToSpace module (NCHW in / NCHW out)."""
    bs = int(block_size)
    N, C, H, W = x.shape
    if C % (bs * bs) != 0:
        raise ValueError("C must be divisible by block_size**2")
    if bs == 1:
        return x
    c_out = C // (bs * bs)

    out = None
    if x.dtype == jnp.float32 or x.dtype == jnp.bfloat16:
        if W % 128 == 0:
            out = _depth_to_space_chunked(x, bs, c_out)
        elif W * bs <= 512:
            out = _depth_to_space_fullwidth(x, bs, c_out)
    if out is not None:
        return out
    # TODO(synk): non-{float32,bfloat16} dtypes, H not a sublane multiple, and very wide
    # non-128-multiple W still use the XLA reference (extra HBM passes); extend the
    # full-width kernel with a masked W-chunked variant if those shapes ever matter.
    return depth_to_space_ref(x, bs)


if __name__ == "__main__":
    key = jax.random.PRNGKey(0)
    fn = jax.jit(depth_to_space, static_argnums=1)

    cases = [
        # (shape NCHW, block_size, dtype)
        ((2, 8, 16, 256), 2, jnp.float32),    # chunked lane-dense path, nw=2 chunks
        ((1, 18, 16, 128), 3, jnp.bfloat16),  # chunked path, bs=3, bf16 (bit exact)
        ((2, 8, 16, 64), 2, jnp.float32),     # full-width path, aligned 128-lane stores
        ((1, 16, 8, 32), 4, jnp.float32),     # full-width path, bs=4, c_out=1
        ((2, 8, 16, 24), 2, jnp.float32),     # full-width path, masked edge stores (W*bs=48)
        ((1, 4, 8, 8), 2, jnp.int32),         # non-float dtype -> XLA reference fallback
    ]
    for shape, bsz, dtype in cases:
        key, sub = jax.random.split(key)
        if jnp.issubdtype(dtype, jnp.floating):
            xh = jax.random.normal(sub, shape, dtype=jnp.float32).astype(dtype)
        else:
            xh = jax.random.randint(sub, shape, -100, 100, dtype=dtype)

        out = jax.block_until_ready(fn(xh, bsz))
        ref = depth_to_space_ref(xh, bsz)

        N, C, H, W = shape
        assert out.shape == (N, C // bsz ** 2, H * bsz, W * bsz), out.shape
        assert out.dtype == xh.dtype

        if dtype == jnp.float32:
            # 3-way bf16 split is exact to ~1 f32 ulp; 1e-6 is ~4000x tighter than the
            # 2^-9 error a default-precision (bf16-rounded) matmul would produce.
            np.testing.assert_allclose(np.asarray(out), np.asarray(ref),
                                       rtol=1e-6, atol=1e-6)
        else:
            np.testing.assert_array_equal(np.asarray(out.astype(jnp.float32)),
                                          np.asarray(ref.astype(jnp.float32)))

    print("KERNEL_OK")
</pallas_src>

<mosaic_0001>
module attributes {stable_mosaic.version = 11 : i64} {
  func.func @_d2s_chunked_kernel(%arg0: i32, %arg1: i32, %arg2: i32, %arg3: i32, %arg4: memref<2x128x256xbf16, #tpu.memory_space<vmem>>, %arg5: memref<1x4x16x128xf32, #tpu.memory_space<vmem>>, %arg6: memref<1x2x16x256xf32, #tpu.memory_space<vmem>>) attributes {dimension_semantics = [#tpu.dimension_semantics<parallel>, #tpu.dimension_semantics<parallel>, #tpu.dimension_semantics<parallel>, #tpu.dimension_semantics<parallel>], iteration_bounds = array<i64: 2, 2, 1, 2>, scalar_prefetch = 0 : i64, scratch_operands = 0 : i64, tpu.core_type = #tpu.core_type<tc>, window_params = [{pipeline_mode = #tpu.pipeline_mode<synchronous>, transform_indices = @transform_0, window_bounds = array<i64: 2, 128, 256>}, {transform_indices = @transform_1, window_bounds = array<i64: 1, 4, 16, 128>}, {transform_indices = @transform_2, window_bounds = array<i64: 1, 2, 16, 256>}]} {
    %cst = arith.constant 0.000000e+00 : f32
    %0 = vector.broadcast %cst : f32 to vector<32x256xf32>
    %c0 = arith.constant 0 : index
    %c0_0 = arith.constant 0 : index
    %c0_1 = arith.constant 0 : index
    %c0_2 = arith.constant 0 : index
    %1 = vector.load %arg5[%c0, %c0_0, %c0_1, %c0_2] : memref<1x4x16x128xf32, #tpu.memory_space<vmem>>, vector<1x2x16x128xf32>
    %2 = vector.shape_cast %1 : vector<1x2x16x128xf32> to vector<2x16x128xf32>
    %3 = vector.shape_cast %2 : vector<2x16x128xf32> to vector<32x128xf32>
    %c0_3 = arith.constant 0 : index
    %c0_4 = arith.constant 0 : index
    %c0_5 = arith.constant 0 : index
    %4 = vector.load %arg4[%c0_3, %c0_4, %c0_5] : memref<2x128x256xbf16, #tpu.memory_space<vmem>>, vector<1x128x256xbf16>
    %5 = vector.shape_cast %4 : vector<1x128x256xbf16> to vector<128x256xbf16>
    %6 = arith.truncf %3 : vector<32x128xf32> to vector<32x128xbf16>
    %7 = arith.extf %6 : vector<32x128xbf16> to vector<32x128xf32>
    %8 = arith.subf %3, %7 : vector<32x128xf32>
    %9 = arith.truncf %8 : vector<32x128xf32> to vector<32x128xbf16>
    %10 = arith.extf %9 : vector<32x128xbf16> to vector<32x128xf32>
    %11 = arith.subf %8, %10 : vector<32x128xf32>
    %12 = arith.truncf %11 : vector<32x128xf32> to vector<32x128xbf16>
    %cst_6 = arith.constant dense<0.000000e+00> : vector<32x256xf32>
    %13 = tpu.matmul %6, %5, %cst_6 {dimension_numbers = #tpu.dot_dimension_numbers<[1], [0], [0], [1], [0, 0, 1, 1], [], []>} : vector<32x128xbf16>, vector<128x256xbf16>, vector<32x256xf32> -> vector<32x256xf32>
    %cst_7 = arith.constant dense<0.000000e+00> : vector<32x256xf32>
    %14 = tpu.matmul %9, %5, %cst_7 {dimension_numbers = #tpu.dot_dimension_numbers<[1], [0], [0], [1], [0, 0, 1, 1], [], []>} : vector<32x128xbf16>, vector<128x256xbf16>, vector<32x256xf32> -> vector<32x256xf32>
    %15 = arith.addf %13, %14 : vector<32x256xf32>
    %cst_8 = arith.constant dense<0.000000e+00> : vector<32x256xf32>
    %16 = tpu.matmul %12, %5, %cst_8 {dimension_numbers = #tpu.dot_dimension_numbers<[1], [0], [0], [1], [0, 0, 1, 1], [], []>} : vector<32x128xbf16>, vector<128x256xbf16>, vector<32x256xf32> -> vector<32x256xf32>
    %17 = arith.addf %15, %16 : vector<32x256xf32>
    %18 = arith.addf %0, %17 : vector<32x256xf32>
    %c0_9 = arith.constant 0 : index
    %c2 = arith.constant 2 : index
    %c0_10 = arith.constant 0 : index
    %c0_11 = arith.constant 0 : index
    %19 = vector.load %arg5[%c0_9, %c2, %c0_10, %c0_11] : memref<1x4x16x128xf32, #tpu.memory_space<vmem>>, vector<1x2x16x128xf32>
    %20 = vector.shape_cast %19 : vector<1x2x16x128xf32> to vector<2x16x128xf32>
    %21 = vector.shape_cast %20 : vector<2x16x128xf32> to vector<32x128xf32>
    %c1 = arith.constant 1 : index
    %c0_12 = arith.constant 0 : index
    %c0_13 = arith.constant 0 : index
    %22 = vector.load %arg4[%c1, %c0_12, %c0_13] : memref<2x128x256xbf16, #tpu.memory_space<vmem>>, vector<1x128x256xbf16>
    %23 = vector.shape_cast %22 : vector<1x128x256xbf16> to vector<128x256xbf16>
    %24 = arith.truncf %21 : vector<32x128xf32> to vector<32x128xbf16>
    %25 = arith.extf %24 : vector<32x128xbf16> to vector<32x128xf32>
    %26 = arith.subf %21, %25 : vector<32x128xf32>
    %27 = arith.truncf %26 : vector<32x128xf32> to vector<32x128xbf16>
    %28 = arith.extf %27 : vector<32x128xbf16> to vector<32x128xf32>
    %29 = arith.subf %26, %28 : vector<32x128xf32>
    %30 = arith.truncf %29 : vector<32x128xf32> to vector<32x128xbf16>
    %cst_14 = arith.constant dense<0.000000e+00> : vector<32x256xf32>
    %31 = tpu.matmul %24, %23, %cst_14 {dimension_numbers = #tpu.dot_dimension_numbers<[1], [0], [0], [1], [0, 0, 1, 1], [], []>} : vector<32x128xbf16>, vector<128x256xbf16>, vector<32x256xf32> -> vector<32x256xf32>
    %cst_15 = arith.constant dense<0.000000e+00> : vector<32x256xf32>
    %32 = tpu.matmul %27, %23, %cst_15 {dimension_numbers = #tpu.dot_dimension_numbers<[1], [0], [0], [1], [0, 0, 1, 1], [], []>} : vector<32x128xbf16>, vector<128x256xbf16>, vector<32x256xf32> -> vector<32x256xf32>
    %33 = arith.addf %31, %32 : vector<32x256xf32>
    %cst_16 = arith.constant dense<0.000000e+00> : vector<32x256xf32>
    %34 = tpu.matmul %30, %23, %cst_16 {dimension_numbers = #tpu.dot_dimension_numbers<[1], [0], [0], [1], [0, 0, 1, 1], [], []>} : vector<32x128xbf16>, vector<128x256xbf16>, vector<32x256xf32> -> vector<32x256xf32>
    %35 = arith.addf %33, %34 : vector<32x256xf32>
    %36 = arith.addf %18, %35 : vector<32x256xf32>
    %37 = vector.shape_cast %36 : vector<32x256xf32> to vector<2x16x256xf32>
    %c0_17 = arith.constant 0 : index
    %c0_18 = arith.constant 0 : index
    %c0_19 = arith.constant 0 : index
    %c0_20 = arith.constant 0 : index
    %38 = vector.load %arg6[%c0_17, %c0_18, %c0_19, %c0_20] : memref<1x2x16x256xf32, #tpu.memory_space<vmem>>, vector<1x2x16x256xf32>
    %39 = vector.shape_cast %38 : vector<1x2x16x256xf32> to vector<2x16x256xf32>
    %40 = vector.shape_cast %37 : vector<2x16x256xf32> to vector<1x2x16x256xf32>
    tpu.vector_store %arg6[%c0_17, %c0_18, %c0_19, %c0_20], %40 {strides = array<i32>} : memref<1x2x16x256xf32, #tpu.memory_space<vmem>>, vector<1x2x16x256xf32>,
    return
  }
  func.func @transform_0(%arg0: i32, %arg1: i32, %arg2: i32, %arg3: i32) -> (i32, i32, i32) {
    %c0_i32 = arith.constant 0 : i32
    %c0_i32_0 = arith.constant 0 : i32
    %c0_i32_1 = arith.constant 0 : i32
    %c0_i32_2 = arith.constant 0 : i32
    return %c0_i32, %c0_i32_0, %c0_i32_1 : i32, i32, i32
  }
  func.func @transform_1(%arg0: i32, %arg1: i32, %arg2: i32, %arg3: i32) -> (i32, i32, i32, i32) {
    %c0_i32 = arith.constant 0 : i32
    return %arg0, %arg1, %arg2, %arg3 : i32, i32, i32, i32
  }
  func.func @transform_2(%arg0: i32, %arg1: i32, %arg2: i32, %arg3: i32) -> (i32, i32, i32, i32) {
    %c2_i32 = arith.constant 2 : i32
    %0 = arith.muli %arg1, %c2_i32 : i32
    %1 = arith.addi %0, %arg3 : i32
    %c0_i32 = arith.constant 0 : i32
    %c0_i32_0 = arith.constant 0 : i32
    return %arg0, %c0_i32, %arg2, %1 : i32, i32, i32, i32
  }
}

</mosaic_0001>

<llo_original>
// kernel: depth_to_space.1
$region0: #{depth_to_space.1}
  #allocation0 [shape = 'u32[]', space=smem, size = 0x4, offset = 0x4, fixed_abs, tag = 'smem constant byte address 0x4 - core index']
  #allocation1 [shape = 'u32[72,128]{1,0:T(1,128)}', space=vmem, size = 0x9000, scoped, tag = 'internal scratch']
  %s0 = inlined_call_operand.vmem [shape: bf16[2,128,256], index: 0, kind: input, shape index: {}]
  %s1 = inlined_call_operand.vmem [shape: f32[2,8,16,256], index: 1, kind: input, shape index: {}]
  %s2 = inlined_call_operand.vmem [shape: f32[2,2,16,1024], index: 2, kind: output, shape index: {}]
  %s3 = sld [smem:[#allocation0]]
  $region98: #{depth_to_space.1} parent=0
    _
  %s5 = ssub.s32 1, %s3
  %s6 = scalar_select 0, %s5, %s3
  $region1: #{depth_to_space.1} parent=0
    #allocation2 [shape = 'u8[65536]{0}', space=vmem, size = 0x10000, scoped, tag = 'input window, operand 1']
    #allocation3 [shape = 'u8[65536]{0}', space=vmem, size = 0x10000, scoped, tag = 'output window, operand 0']
    loop: start=0, step=1, limit=10
    $region2: #{depth_to_space.1} parent=1 // loop_pre_header
      _
    $region3: #{depth_to_space.1} parent=1 // loop_header
      %s8 = sphi 0, %s12
      %p9 = scmp.ge.s32.totalorder %s8, 10
      %s15 = sphi 0, %s41
      %s16 = sphi 0, %s37
      %s17 = sphi 0, %s33
      %s18 = sphi 0, %s29
      %s19 = sphi 0, %s15
      %s20 = sphi 0, %s16
      %s21 = sphi 0, %s17
      %s22 = sphi 0, %s18
      %s23 = sphi 0, %s19
      %s24 = sphi 0, %s20
      %s25 = sphi 0, %s21
      %s26 = sphi 0, %s22
      %s42 = sphi 0, %s42
      %s44 = sphi 0, %s42
      %s45 = sphi 0, %s44
      %s59 = sphi 0, %s45
      %s71 = sphi 0, %s73
      %s74 = sphi 0, %s71
      %s75 = sphi 0, %s74
      %s91 = sphi 0, %s75
      %s105 = sphi 0, %s107
      %s108 = sphi 0, %s105
      %s109 = sphi 0, %s108
      %s125 = sphi 0, %s109
    $region4: #{depth_to_space.1} parent=1 // loop_header_branch
      %11 = sbr.rel (%p9) target = $region8
    $region5: #{depth_to_space.1} parent=1 // loop_body
      %s13 = ssub.s32 %s8, 1
      %s14 = ssub.s32 %s8, 2
      %s27 = sadd.s32 1, %s18
      %p28 = scmp.ge.s32.totalorder %s27, 2
      %s29 = scalar_select %p28, 0, %s27
      %s30 = sadd.s32 1, %s17
      %s31 = scalar_select %p28, %s30, %s17
      %p32 = scmp.ge.s32.totalorder %s31, 1
      %s33 = scalar_select %p32, 0, %s31
      %s34 = sadd.s32 1, %s16
      %s35 = scalar_select %p32, %s34, %s16
      %p36 = scmp.ge.s32.totalorder %s35, 2
      %s37 = scalar_select %p36, 0, %s35
      %s38 = sadd.s32 1, %s15
      %s39 = scalar_select %p36, %s38, %s15
      %p40 = scmp.ge.s32.totalorder %s39, 2
      %s41 = scalar_select %p40, 0, %s39
      %s43 = sadd.s32 %s42, 1
      %p46 = scmp.eq.s32.totalorder %s8, 7
      %p47 = scmp.ne.s32.totalorder %s42, %s44
      %p48 = scmp.eq.s32.totalorder %s8, 0
      %p49 = por %p47, %p48
      %p50 = scmp.ne.s32.totalorder %s42, %s44
      %p51 = scmp.eq.s32.totalorder %s13, 7
      %p52 = por %p50, %p51
      %p53 = scmp.ne.s32.totalorder %s44, %s45
      %p54 = scmp.eq.s32.totalorder %s13, 0
      %p55 = por %p53, %p54
      %p56 = scmp.ne.s32.totalorder %s44, %s45
      %p57 = scmp.eq.s32.totalorder %s14, 7
      %p58 = por %p56, %p57
      %p60 = scmp.ne.s32.totalorder %s45, %s59
      %p61 = scmp.eq.s32.totalorder %s14, 0
      %p62 = por %p60, %p61
      %s63 = ssub.s32 %s15, %s41
      %s64 = ssub.s32 %s16, %s37
      %s65 = sor.u32 %s63, %s64
      %s66 = ssub.s32 %s17, %s33
      %s67 = sor.u32 %s65, %s66
      %s68 = ssub.s32 %s18, %s29
      %s69 = sor.u32 %s67, %s68
      %p70 = scmp.eq.s32.totalorder %s69, 0
      %s72 = sadd.s32 %s71, 1
      %s73 = scalar_select %p70, %s71, %s72
      %p76 = pneg %p70
      %p77 = scmp.eq.s32.totalorder %s8, 7
      %p78 = por %p76, %p77
      %p79 = scmp.ne.s32.totalorder %s71, %s74
      %p80 = scmp.eq.s32.totalorder %s8, 0
      %p81 = por %p79, %p80
      %p82 = scmp.ne.s32.totalorder %s71, %s74
      %p83 = scmp.eq.s32.totalorder %s13, 7
      %p84 = por %p82, %p83
      %p85 = scmp.ne.s32.totalorder %s74, %s75
      %p86 = scmp.eq.s32.totalorder %s13, 0
      %p87 = por %p85, %p86
      %p88 = scmp.ne.s32.totalorder %s74, %s75
      %p89 = scmp.eq.s32.totalorder %s14, 7
      %p90 = por %p88, %p89
      %p92 = scmp.ne.s32.totalorder %s75, %s91
      %p93 = scmp.eq.s32.totalorder %s14, 0
      %p94 = por %p92, %p93
      %s95 = smul.u32 %s16, 2
      %s96 = sadd.s32 %s95, %s18
      %s97 = smul.u32 %s37, 2
      %s98 = sadd.s32 %s97, %s29
      %s99 = ssub.s32 %s15, %s41
      %s100 = ssub.s32 %s17, %s33
      %s101 = sor.u32 %s99, %s100
      %s102 = ssub.s32 %s96, %s98
      %s103 = sor.u32 %s101, %s102
      %p104 = scmp.eq.s32.totalorder %s103, 0
      %s106 = sadd.s32 %s105, 1
      %s107 = scalar_select %p104, %s105, %s106
      %p110 = pneg %p104
      %p111 = scmp.eq.s32.totalorder %s8, 7
      %p112 = por %p110, %p111
      %p113 = scmp.ne.s32.totalorder %s105, %s108
      %p114 = scmp.eq.s32.totalorder %s8, 0
      %p115 = por %p113, %p114
      %p116 = scmp.ne.s32.totalorder %s105, %s108
      %p117 = scmp.eq.s32.totalorder %s13, 7
      %p118 = por %p116, %p117
      %p119 = scmp.ne.s32.totalorder %s108, %s109
      %p120 = scmp.eq.s32.totalorder %s13, 0
      %p121 = por %p119, %p120
      %p122 = scmp.ne.s32.totalorder %s108, %s109
      %p123 = scmp.eq.s32.totalorder %s14, 7
      %p124 = por %p122, %p123
      %p126 = scmp.ne.s32.totalorder %s109, %s125
      %p127 = scmp.eq.s32.totalorder %s14, 0
      %p128 = por %p126, %p127
      %p129 = scmp.le.s32.totalorder 1, %s8
      %p130 = scmp.lt.s32.totalorder %s8, 9
      %p131 = pnand %p129, %p130
      %p132 = pneg %p131
      // Predicated region
      $region9: #{depth_to_space.1} parent=5 // pred_check
        _
      $region10: #{depth_to_space.1} parent=5 // pred_check_branch
        %134 = sbr.rel (%p131) target = $region12
      $region11: #{depth_to_space.1} parent=5 // pred_region
        %s135 = ssub.s32 %s8, 1
        // Predicated region
        $region13: #{depth_to_space.1} parent=11 // pred_check
          %p136 = pneg %p55
        $region14: #{depth_to_space.1} parent=11 // pred_check_branch
          %138 = sbr.rel (%p136) target = $region16
        $region15: #{depth_to_space.1} parent=11 // pred_region
          _
        $region16: #{depth_to_space.1} parent=11 // pred_fallthru
          _
      $region12: #{depth_to_space.1} parent=5 // pred_fallthru
        _
      %p139 = scmp.lt.s32.totalorder %s8, 8
      // Predicated region
      $region17: #{depth_to_space.1} parent=5 // pred_check
        %p140 = pneg %p139
      $region18: #{depth_to_space.1} parent=5 // pred_check_branch
        %142 = sbr.rel (%p140) target = $region20
      $region19: #{depth_to_space.1} parent=5 // pred_region
        // Predicated region
        $region21: #{depth_to_space.1} parent=19 // pred_check
          %p143 = pneg %p81
        $region22: #{depth_to_space.1} parent=19 // pred_check_branch
          %145 = sbr.rel (%p143) target = $region24
        $region23: #{depth_to_space.1} parent=19 // pred_region
          %s146 = sand.u32 %s71, 1
          %s147 = sand.u32 %s71, 1
          %s148 = smul.addr %s147, 64
          %s149 = scalar_lea.vmem [#allocation2], %s148
          %s150 = smul.u32 4, %s16
          %s151 = smul.u32 2, %s17
          %s152 = smul.addr %s151, 2
          %s153 = sadd.s32 %s18, %s152
          %s154 = smul.addr %s150, 4
          %s155 = sadd.s32 %s153, %s154
          %s156 = smul.addr %s15, 32
          %s157 = sadd.s32 %s155, %s156
          %s158 = smul.addr %s157, 8
          %s159 = scalar_lea.vmem %s1, %s158
          // Predicated region
          $region25: #{depth_to_space.1} parent=23 // pred_check
            _
          $region26: #{depth_to_space.1} parent=23 // pred_check_branch
            %161 = sbr.rel (0) target = $region28
          $region27: #{depth_to_space.1} parent=23 // pred_region
            // Predicated region
            $region29: #{depth_to_space.1} parent=27 // pred_check
              _
            $region30: #{depth_to_space.1} parent=27 // pred_check_branch
              %163 = sbr.rel (0) target = $region32
            $region31: #{depth_to_space.1} parent=27 // pred_region
              // Predicated region
              $region44: #{depth_to_space.1} parent=31 // pred_check
                _
              $region45: #{depth_to_space.1} parent=31 // pred_check_branch
                %193 = sbr.rel (0) target = $region47
              $region46: #{depth_to_space.1} parent=31 // pred_region
                loop: start=0, step=1, limit=1
                $region48: #{depth_to_space.1} parent=46 // loop_pre_header
                  _
                $region49: #{depth_to_space.1} parent=46 // loop_header
                  %s195 = sphi 0, %s199
                  %p196 = scmp.ge.s32.totalorder %s195, 1
                  %s200 = sphi %s159, %s159
                  %s201 = sphi %s149, %s149
                $region50: #{depth_to_space.1} parent=46 // loop_header_branch
                  %198 = sbr.rel (%p196) target = $region54
                $region51: #{depth_to_space.1} parent=46 // loop_body
                  %v202 = vld [vmem:[%s200] sm:$0xff]
                  %203 = vst [vmem:[%s201] sm:$0xff] %v202
                  %v204 = vld [vmem:[%s200 + $0x10] sm:$0xff]
                  %205 = vst [vmem:[%s201 + $0x8] sm:$0xff] %v204
                  %v206 = vld [vmem:[%s200 + $0x20] sm:$0xff]
                  %207 = vst [vmem:[%s201 + $0x10] sm:$0xff] %v206
                  %v208 = vld [vmem:[%s200 + $0x30] sm:$0xff]
                  %209 = vst [vmem:[%s201 + $0x18] sm:$0xff] %v208
                  %v210 = vld [vmem:[%s200 + $0x40] sm:$0xff]
                  %211 = vst [vmem:[%s201 + $0x20] sm:$0xff] %v210
                  %v212 = vld [vmem:[%s200 + $0x50] sm:$0xff]
                  %213 = vst [vmem:[%s201 + $0x28] sm:$0xff] %v212
                  %v214 = vld [vmem:[%s200 + $0x60] sm:$0xff]
                  %215 = vst [vmem:[%s201 + $0x30] sm:$0xff] %v214
                  %v216 = vld [vmem:[%s200 + $0x70] sm:$0xff]
                  %217 = vst [vmem:[%s201 + $0x38] sm:$0xff] %v216
                $region52: #{depth_to_space.1} parent=46 // loop_footer
                  %s199 = sadd.s32 1, %s195
                $region53: #{depth_to_space.1} parent=46 // loop_footer_branch
                  %194 = sbr.rel target = $region49
                $region54: #{depth_to_space.1} parent=46 // loop_exit
                  _
              $region47: #{depth_to_space.1} parent=31 // pred_fallthru
                _
              // Predicated region
              $region55: #{depth_to_space.1} parent=31 // pred_check
                _
              $region56: #{depth_to_space.1} parent=31 // pred_check_branch
                %219 = sbr.rel target = $region58
              $region57: #{depth_to_space.1} parent=31 // pred_region
                _
              $region58: #{depth_to_space.1} parent=31 // pred_fallthru
                _
            $region32: #{depth_to_space.1} parent=27 // pred_fallthru
              _
            // Predicated region
            $region33: #{depth_to_space.1} parent=27 // pred_check
              _
            $region34: #{depth_to_space.1} parent=27 // pred_check_branch
              %165 = sbr.rel target = $region36
            $region35: #{depth_to_space.1} parent=27 // pred_region
              %s167 = ssub.s32 256, 1
              loop: start=0, step=1, limit=1
              $region37: #{depth_to_space.1} parent=35 // loop_pre_header
                _
              $region38: #{depth_to_space.1} parent=35 // loop_header
                %s169 = sphi 0, %s173
                %p170 = scmp.ge.s32.totalorder %s169, 1
                %s174 = sphi %s159, %s159
                %s175 = sphi %s149, %s149
              $region39: #{depth_to_space.1} parent=35 // loop_header_branch
                %172 = sbr.rel (%p170) target = $region43
              $region40: #{depth_to_space.1} parent=35 // loop_body
                %v176 = vld [vmem:[%s174] sm:%s167]
                %177 = vst [vmem:[%s175] sm:%s167] %v176
                %v178 = vld [vmem:[%s174 + $0x10] sm:%s167]
                %179 = vst [vmem:[%s175 + $0x8] sm:%s167] %v178
                %v180 = vld [vmem:[%s174 + $0x20] sm:%s167]
                %181 = vst [vmem:[%s175 + $0x10] sm:%s167] %v180
                %v182 = vld [vmem:[%s174 + $0x30] sm:%s167]
                %183 = vst [vmem:[%s175 + $0x18] sm:%s167] %v182
                %v184 = vld [vmem:[%s174 + $0x40] sm:%s167]
                %185 = vst [vmem:[%s175 + $0x20] sm:%s167] %v184
                %v186 = vld [vmem:[%s174 + $0x50] sm:%s167]
                %187 = vst [vmem:[%s175 + $0x28] sm:%s167] %v186
                %v188 = vld [vmem:[%s174 + $0x60] sm:%s167]
                %189 = vst [vmem:[%s175 + $0x30] sm:%s167] %v188
                %v190 = vld [vmem:[%s174 + $0x70] sm:%s167]
                %191 = vst [vmem:[%s175 + $0x38] sm:%s167] %v190
              $region41: #{depth_to_space.1} parent=35 // loop_footer
                %s173 = sadd.s32 1, %s169
              $region42: #{depth_to_space.1} parent=35 // loop_footer_branch
                %168 = sbr.rel target = $region38
              $region43: #{depth_to_space.1} parent=35 // loop_exit
                _
            $region36: #{depth_to_space.1} parent=27 // pred_fallthru
              _
          $region28: #{depth_to_space.1} parent=23 // pred_fallthru
            _
          %220 = vnop
        $region24: #{depth_to_space.1} parent=19 // pred_fallthru
          _
      $region20: #{depth_to_space.1} parent=5 // pred_fallthru
        _
      %p221 = scmp.le.s32.totalorder 1, %s8
      %p222 = scmp.lt.s32.totalorder %s8, 9
      %p223 = pnand %p221, %p222
      %p224 = pneg %p223
      // Predicated region
      $region59: #{depth_to_space.1} parent=5 // pred_check
        _
      $region60: #{depth_to_space.1} parent=5 // pred_check_branch
        %226 = sbr.rel (%p223) target = $region62
      $region61: #{depth_to_space.1} parent=5 // pred_region
        %s227 = ssub.s32 %s8, 1
        %s228 = sand.u32 %s74, 1
        %s229 = sand.u32 %s74, 1
        %s230 = smul.addr %s229, 64
        %s231 = scalar_lea.vmem [#allocation2], %s230
        // Predicated region
        $region63: #{depth_to_space.1} parent=61 // pred_check
          %p232 = pneg %p87
        $region64: #{depth_to_space.1} parent=61 // pred_check_branch
          %234 = sbr.rel (%p232) target = $region66
        $region65: #{depth_to_space.1} parent=61 // pred_region
          _
        $region66: #{depth_to_space.1} parent=61 // pred_fallthru
          _
        %p235 = pneg %p55
        %p236 = pneg %p52
        %s237 = sand.u32 %s74, 1
        %s238 = sand.u32 %s74, 1
        %s239 = smul.addr %s238, 64
        %s240 = scalar_lea.vmem [#allocation2], %s239
        %p241 = pneg %p87
        %p242 = pneg %p84
        %p243 = pneg %p121
        %p244 = pneg %p118
        %s245 = sand.u32 %s108, 1
        %s246 = sand.u32 %s108, 1
        %s247 = smul.addr %s246, 64
        %s248 = scalar_lea.vmem [#allocation3], %s247
        %s249 = smul.u32 4, %s20
        %s250 = smul.u32 2, %s21
        %s251 = smul.u32 %s20, 2
        %s252 = sadd.s32 %s251, %s22
        %s253 = smul.u32 2, %s21
        %s254 = smul.u32 2, %s252
        %v255 = vld [vmem:[%s231] sm:$0xff]
        %v256 = vld [vmem:[%s231 + $0x8] sm:$0xff]
        %v257 = vld [vmem:[%s231 + $0x10] sm:$0xff]
        %v258 = vld [vmem:[%s231 + $0x18] sm:$0xff]
        %v259 = vld [vmem:[%s0] sm:$0xff]
        %v260 = vld [vmem:[%s0 + $0x8] sm:$0xff]
        %v261 = vld [vmem:[%s0 + $0x10] sm:$0xff]
        %v262 = vld [vmem:[%s0 + $0x18] sm:$0xff]
        %v263 = vld [vmem:[%s0 + $0x20] sm:$0xff]
        %v264 = vld [vmem:[%s0 + $0x28] sm:$0xff]
        %v265 = vld [vmem:[%s0 + $0x30] sm:$0xff]
        %v266 = vld [vmem:[%s0 + $0x38] sm:$0xff]
        %v267 = vld [vmem:[%s0 + $0x40] sm:$0xff]
        %v268 = vld [vmem:[%s0 + $0x48] sm:$0xff]
        %v269 = vld [vmem:[%s0 + $0x50] sm:$0xff]
        %v270 = vld [vmem:[%s0 + $0x58] sm:$0xff]
        %v271 = vld [vmem:[%s0 + $0x60] sm:$0xff]
        %v272 = vld [vmem:[%s0 + $0x68] sm:$0xff]
        %v273 = vld [vmem:[%s0 + $0x70] sm:$0xff]
        %v274 = vld [vmem:[%s0 + $0x78] sm:$0xff]
        %v275 = vpack.c.bf16 %v255, %v255
        %v276 = vpack.c.bf16 %v256, %v256
        %v277 = vpack.c.bf16 %v257, %v257
        %v278 = vpack.c.bf16 %v258, %v258
        %v279 = vunpack.c.l.bf16 %v275
        %v280 = vunpack.c.l.bf16 %v276
        %v281 = vunpack.c.l.bf16 %v277
        %v282 = vunpack.c.l.bf16 %v278
        %v283 = vsub.f32 %v255, %v279
        %v284 = vsub.f32 %v256, %v280
        %v285 = vsub.f32 %v257, %v281
        %v286 = vsub.f32 %v258, %v282
        %v287 = vpack.c.bf16 %v283, %v283
        %v288 = vpack.c.bf16 %v284, %v284
        %v289 = vpack.c.bf16 %v285, %v285
        %v290 = vpack.c.bf16 %v286, %v286
        %v291 = vunpack.c.l.bf16 %v287
        %v292 = vunpack.c.l.bf16 %v288
        %v293 = vunpack.c.l.bf16 %v289
        %v294 = vunpack.c.l.bf16 %v290
        %v295 = vsub.f32 %v283, %v291
        %v296 = vsub.f32 %v284, %v292
        %v297 = vsub.f32 %v285, %v293
        %v298 = vsub.f32 %v286, %v294
        %v299 = vpack.c.bf16 %v296, %v295
        %v300 = vpack.c.bf16 %v298, %v297
        %v305 = vunpack.c.l.b16 %v287
        %v306 = vunpack.c.l.b16 %v288
        %v307 = vunpack.c.l.b16 %v289
        %v308 = vunpack.c.l.b16 %v290
        %v309 = vpack.c.b16 %v306, %v305
        %v310 = vpack.c.b16 %v308, %v307
        %v329 = vunpack.c.l.b16 %v259
        %v330 = vunpack.c.h.b16 %v259
        %v331 = vunpack.c.l.b16 %v260
        %v332 = vunpack.c.h.b16 %v260
        %v333 = vunpack.c.l.b16 %v261
        %v334 = vunpack.c.h.b16 %v261
        %v335 = vunpack.c.l.b16 %v262
        %v336 = vunpack.c.h.b16 %v262
        %v337 = vunpack.c.l.b16 %v263
        %v338 = vunpack.c.h.b16 %v263
        %v339 = vunpack.c.l.b16 %v264
        %v340 = vunpack.c.h.b16 %v264
        %v341 = vunpack.c.l.b16 %v265
        %v342 = vunpack.c.h.b16 %v265
        %v343 = vunpack.c.l.b16 %v266
        %v344 = vunpack.c.h.b16 %v266
        %v345 = vunpack.c.l.b16 %v267
        %v346 = vunpack.c.h.b16 %v267
        %v347 = vunpack.c.l.b16 %v268
        %v348 = vunpack.c.h.b16 %v268
        %v349 = vunpack.c.l.b16 %v269
        %v350 = vunpack.c.h.b16 %v269
        %v351 = vunpack.c.l.b16 %v270
        %v352 = vunpack.c.h.b16 %v270
        %v353 = vunpack.c.l.b16 %v271
        %v354 = vunpack.c.h.b16 %v271
        %v355 = vunpack.c.l.b16 %v272
        %v356 = vunpack.c.h.b16 %v272
        %v357 = vunpack.c.l.b16 %v273
        %v358 = vunpack.c.h.b16 %v273
        %v359 = vunpack.c.l.b16 %v274
        %v360 = vunpack.c.h.b16 %v274
        %v361 = vpack.c.b16 %v331, %v329
        %v362 = vpack.c.b16 %v332, %v330
        %v363 = vpack.c.b16 %v335, %v333
        %v364 = vpack.c.b16 %v336, %v334
        %v365 = vpack.c.b16 %v339, %v337
        %v366 = vpack.c.b16 %v340, %v338
        %v367 = vpack.c.b16 %v343, %v341
        %v368 = vpack.c.b16 %v344, %v342
        %v369 = vpack.c.b16 %v347, %v345
        %v370 = vpack.c.b16 %v348, %v346
        %v371 = vpack.c.b16 %v351, %v349
        %v372 = vpack.c.b16 %v352, %v350
        %v373 = vpack.c.b16 %v355, %v353
        %v374 = vpack.c.b16 %v356, %v354
        %v375 = vpack.c.b16 %v359, %v357
        %v376 = vpack.c.b16 %v360, %v358
        %393 = vmatpush.bf16.msra.mxu0 %v375
        %394 = vmatpush.bf16.msra.mxu0 %v373
        %395 = vmatpush.bf16.msra.mxu0 %v371
        %396 = vmatpush.bf16.msra.mxu0 %v369
        %397 = vmatpush.bf16.msra.mxu0 %v367
        %398 = vmatpush.bf16.msra.mxu0 %v365
        %399 = vmatpush.bf16.msra.mxu0 %v363
        %400 = vmatpush.bf16.msra.mxu0 %v361
        %401 = vmatmul.bf16.gmra.mxu0 %v309
        %v402 = vpop.f32.mrf.mxu0
        %v403 = vadd.f32 0.0, %v402
        %v404 = vpop.f32.mrf.mxu0
        %v405 = vadd.f32 0.0, %v404
        %406 = vmatmul.bf16.gmra.mxu0 %v310
        %v407 = vpop.f32.mrf.mxu0
        %v408 = vadd.f32 0.0, %v407
        %v409 = vpop.f32.mrf.mxu0
        %v410 = vadd.f32 0.0, %v409
        %411 = vdwg.mxu0
        %412 = vmatpush.bf16.msra.mxu0 %v376
        %413 = vmatpush.bf16.msra.mxu0 %v374
        %414 = vmatpush.bf16.msra.mxu0 %v372
        %415 = vmatpush.bf16.msra.mxu0 %v370
        %416 = vmatpush.bf16.msra.mxu0 %v368
        %417 = vmatpush.bf16.msra.mxu0 %v366
        %418 = vmatpush.bf16.msra.mxu0 %v364
        %419 = vmatpush.bf16.msra.mxu0 %v362
        %420 = vmatmul.bf16.gmra.mxu0 %v309
        %v421 = vpop.f32.mrf.mxu0
        %v422 = vadd.f32 0.0, %v421
        %v423 = vpop.f32.mrf.mxu0
        %v424 = vadd.f32 0.0, %v423
        %425 = vmatmul.bf16.gmra.mxu0 %v310
        %v426 = vpop.f32.mrf.mxu0
        %v427 = vadd.f32 0.0, %v426
        %v428 = vpop.f32.mrf.mxu0
        %v429 = vadd.f32 0.0, %v428
        %430 = vdwg.mxu0
        %v435 = vunpack.c.l.b16 %v275
        %v436 = vunpack.c.l.b16 %v276
        %v437 = vunpack.c.l.b16 %v277
        %v438 = vunpack.c.l.b16 %v278
        %v439 = vpack.c.b16 %v436, %v435
        %v440 = vpack.c.b16 %v438, %v437
        %443 = vmatpush.bf16.msra.mxu0 %v375
        %444 = vmatpush.bf16.msra.mxu0 %v373
        %445 = vmatpush.bf16.msra.mxu0 %v371
        %446 = vmatpush.bf16.msra.mxu0 %v369
        %447 = vmatpush.bf16.msra.mxu0 %v367
        %448 = vmatpush.bf16.msra.mxu0 %v365
        %449 = vmatpush.bf16.msra.mxu0 %v363
        %450 = vmatpush.bf16.msra.mxu0 %v361
        %451 = vmatmul.bf16.gmra.mxu0 %v439
        %v452 = vpop.f32.mrf.mxu0
        %v453 = vadd.f32 %v403, %v452
        %v454 = vpop.f32.mrf.mxu0
        %v455 = vadd.f32 %v405, %v454
        %456 = vmatmul.bf16.gmra.mxu0 %v440
        %v457 = vpop.f32.mrf.mxu0
        %v458 = vadd.f32 %v408, %v457
        %v459 = vpop.f32.mrf.mxu0
        %v460 = vadd.f32 %v410, %v459
        %461 = vdwg.mxu0
        %462 = vmatpush.bf16.msra.mxu0 %v376
        %463 = vmatpush.bf16.msra.mxu0 %v374
        %464 = vmatpush.bf16.msra.mxu0 %v372
        %465 = vmatpush.bf16.msra.mxu0 %v370
        %466 = vmatpush.bf16.msra.mxu0 %v368
        %467 = vmatpush.bf16.msra.mxu0 %v366
        %468 = vmatpush.bf16.msra.mxu0 %v364
        %469 = vmatpush.bf16.msra.mxu0 %v362
        %470 = vmatmul.bf16.gmra.mxu0 %v439
        %v471 = vpop.f32.mrf.mxu0
        %v472 = vadd.f32 %v422, %v471
        %v473 = vpop.f32.mrf.mxu0
        %v474 = vadd.f32 %v424, %v473
        %475 = vmatmul.bf16.gmra.mxu0 %v440
        %v476 = vpop.f32.mrf.mxu0
        %v477 = vadd.f32 %v427, %v476
        %v478 = vpop.f32.mrf.mxu0
        %v479 = vadd.f32 %v429, %v478
        %480 = vdwg.mxu0
        %481 = vmatpush.bf16.msra.mxu0 %v375
        %482 = vmatpush.bf16.msra.mxu0 %v373
        %483 = vmatpush.bf16.msra.mxu0 %v371
        %484 = vmatpush.bf16.msra.mxu0 %v369
        %485 = vmatpush.bf16.msra.mxu0 %v367
        %486 = vmatpush.bf16.msra.mxu0 %v365
        %487 = vmatpush.bf16.msra.mxu0 %v363
        %488 = vmatpush.bf16.msra.mxu0 %v361
        %489 = vmatmul.bf16.gmra.mxu0 %v299
        %v490 = vpop.f32.mrf.mxu0
        %v491 = vadd.f32 0.0, %v490
        %v492 = vpop.f32.mrf.mxu0
        %v493 = vadd.f32 0.0, %v492
        %494 = vmatmul.bf16.gmra.mxu0 %v300
        %v495 = vpop.f32.mrf.mxu0
        %v496 = vadd.f32 0.0, %v495
        %v497 = vpop.f32.mrf.mxu0
        %v498 = vadd.f32 0.0, %v497
        %499 = vdwg.mxu0
        %500 = vmatpush.bf16.msra.mxu0 %v376
        %501 = vmatpush.bf16.msra.mxu0 %v374
        %502 = vmatpush.bf16.msra.mxu0 %v372
        %503 = vmatpush.bf16.msra.mxu0 %v370
        %504 = vmatpush.bf16.msra.mxu0 %v368
        %505 = vmatpush.bf16.msra.mxu0 %v366
        %506 = vmatpush.bf16.msra.mxu0 %v364
        %507 = vmatpush.bf16.msra.mxu0 %v362
        %508 = vmatmul.bf16.gmra.mxu0 %v299
        %v509 = vpop.f32.mrf.mxu0
        %v510 = vadd.f32 0.0, %v509
        %v511 = vpop.f32.mrf.mxu0
        %v512 = vadd.f32 0.0, %v511
        %513 = vmatmul.bf16.gmra.mxu0 %v300
        %v514 = vpop.f32.mrf.mxu0
        %v515 = vadd.f32 0.0, %v514
        %v516 = vpop.f32.mrf.mxu0
        %v517 = vadd.f32 0.0, %v516
        %518 = vdwg.mxu0
        %v519 = vadd.f32 %v453, %v491
        %v520 = vadd.f32 %v472, %v510
        %v521 = vadd.f32 %v455, %v493
        %v522 = vadd.f32 %v474, %v512
        %v523 = vadd.f32 %v458, %v496
        %v524 = vadd.f32 %v477, %v515
        %v525 = vadd.f32 %v460, %v498
        %v526 = vadd.f32 %v479, %v517
        %v527 = vadd.f32 %v519, 0.0
        %v528 = vadd.f32 %v520, 0.0
        %v529 = vadd.f32 %v521, 0.0
        %v530 = vadd.f32 %v522, 0.0
        %v531 = vadd.f32 %v523, 0.0
        %v532 = vadd.f32 %v524, 0.0
        %v533 = vadd.f32 %v525, 0.0
        %v534 = vadd.f32 %v526, 0.0
        %s535 = scalar_lea.vmem %s231, 32 [#allocation2]
        %v536 = vld [vmem:[%s535] sm:$0xff]
        %v537 = vld [vmem:[%s535 + $0x8] sm:$0xff]
        %v538 = vld [vmem:[%s535 + $0x10] sm:$0xff]
        %v539 = vld [vmem:[%s535 + $0x18] sm:$0xff]
        %s540 = scalar_lea.vmem %s0, 128
        %v541 = vld [vmem:[%s540] sm:$0xff]
        %v542 = vld [vmem:[%s540 + $0x8] sm:$0xff]
        %v543 = vld [vmem:[%s540 + $0x10] sm:$0xff]
        %v544 = vld [vmem:[%s540 + $0x18] sm:$0xff]
        %v545 = vld [vmem:[%s540 + $0x20] sm:$0xff]
        %v546 = vld [vmem:[%s540 + $0x28] sm:$0xff]
        %v547 = vld [vmem:[%s540 + $0x30] sm:$0xff]
        %v548 = vld [vmem:[%s540 + $0x38] sm:$0xff]
        %v549 = vld [vmem:[%s540 + $0x40] sm:$0xff]
        %v550 = vld [vmem:[%s540 + $0x48] sm:$0xff]
        %v551 = vld [vmem:[%s540 + $0x50] sm:$0xff]
        %v552 = vld [vmem:[%s540 + $0x58] sm:$0xff]
        %v553 = vld [vmem:[%s540 + $0x60] sm:$0xff]
        %v554 = vld [vmem:[%s540 + $0x68] sm:$0xff]
        %v555 = vld [vmem:[%s540 + $0x70] sm:$0xff]
        %v556 = vld [vmem:[%s540 + $0x78] sm:$0xff]
        %v557 = vpack.c.bf16 %v536, %v536
        %v558 = vpack.c.bf16 %v537, %v537
        %v559 = vpack.c.bf16 %v538, %v538
        %v560 = vpack.c.bf16 %v539, %v539
        %v561 = vunpack.c.l.bf16 %v557
        %v562 = vunpack.c.l.bf16 %v558
        %v563 = vunpack.c.l.bf16 %v559
        %v564 = vunpack.c.l.bf16 %v560
        %v565 = vsub.f32 %v536, %v561
        %v566 = vsub.f32 %v537, %v562
        %v567 = vsub.f32 %v538, %v563
        %v568 = vsub.f32 %v539, %v564
        %v569 = vpack.c.bf16 %v565, %v565
        %v570 = vpack.c.bf16 %v566, %v566
        %v571 = vpack.c.bf16 %v567, %v567
        %v572 = vpack.c.bf16 %v568, %v568
        %v573 = vunpack.c.l.bf16 %v569
        %v574 = vunpack.c.l.bf16 %v570
        %v575 = vunpack.c.l.bf16 %v571
        %v576 = vunpack.c.l.bf16 %v572
        %v577 = vsub.f32 %v565, %v573
        %v578 = vsub.f32 %v566, %v574
        %v579 = vsub.f32 %v567, %v575
        %v580 = vsub.f32 %v568, %v576
        %v581 = vpack.c.bf16 %v578, %v577
        %v582 = vpack.c.bf16 %v580, %v579
        %v587 = vunpack.c.l.b16 %v569
        %v588 = vunpack.c.l.b16 %v570
        %v589 = vunpack.c.l.b16 %v571
        %v590 = vunpack.c.l.b16 %v572
        %v591 = vpack.c.b16 %v588, %v587
        %v592 = vpack.c.b16 %v590, %v589
        %v611 = vunpack.c.l.b16 %v541
        %v612 = vunpack.c.h.b16 %v541
        %v613 = vunpack.c.l.b16 %v542
        %v614 = vunpack.c.h.b16 %v542
        %v615 = vunpack.c.l.b16 %v543
        %v616 = vunpack.c.h.b16 %v543
        %v617 = vunpack.c.l.b16 %v544
        %v618 = vunpack.c.h.b16 %v544
        %v619 = vunpack.c.l.b16 %v545
        %v620 = vunpack.c.h.b16 %v545
        %v621 = vunpack.c.l.b16 %v546
        %v622 = vunpack.c.h.b16 %v546
        %v623 = vunpack.c.l.b16 %v547
        %v624 = vunpack.c.h.b16 %v547
        %v625 = vunpack.c.l.b16 %v548
        %v626 = vunpack.c.h.b16 %v548
        %v627 = vunpack.c.l.b16 %v549
        %v628 = vunpack.c.h.b16 %v549
        %v629 = vunpack.c.l.b16 %v550
        %v630 = vunpack.c.h.b16 %v550
        %v631 = vunpack.c.l.b16 %v551
        %v632 = vunpack.c.h.b16 %v551
        %v633 = vunpack.c.l.b16 %v552
        %v634 = vunpack.c.h.b16 %v552
        %v635 = vunpack.c.l.b16 %v553
        %v636 = vunpack.c.h.b16 %v553
        %v637 = vunpack.c.l.b16 %v554
        %v638 = vunpack.c.h.b16 %v554
        %v639 = vunpack.c.l.b16 %v555
        %v640 = vunpack.c.h.b16 %v555
        %v641 = vunpack.c.l.b16 %v556
        %v642 = vunpack.c.h.b16 %v556
        %v643 = vpack.c.b16 %v613, %v611
        %v644 = vpack.c.b16 %v614, %v612
        %v645 = vpack.c.b16 %v617, %v615
        %v646 = vpack.c.b16 %v618, %v616
        %v647 = vpack.c.b16 %v621, %v619
        %v648 = vpack.c.b16 %v622, %v620
        %v649 = vpack.c.b16 %v625, %v623
        %v650 = vpack.c.b16 %v626, %v624
        %v651 = vpack.c.b16 %v629, %v627
        %v652 = vpack.c.b16 %v630, %v628
        %v653 = vpack.c.b16 %v633, %v631
        %v654 = vpack.c.b16 %v634, %v632
        %v655 = vpack.c.b16 %v637, %v635
        %v656 = vpack.c.b16 %v638, %v636
        %v657 = vpack.c.b16 %v641, %v639
        %v658 = vpack.c.b16 %v642, %v640
        %675 = vmatpush.bf16.msra.mxu0 %v657
        %676 = vmatpush.bf16.msra.mxu0 %v655
        %677 = vmatpush.bf16.msra.mxu0 %v653
        %678 = vmatpush.bf16.msra.mxu0 %v651
        %679 = vmatpush.bf16.msra.mxu0 %v649
        %680 = vmatpush.bf16.msra.mxu0 %v647
        %681 = vmatpush.bf16.msra.mxu0 %v645
        %682 = vmatpush.bf16.msra.mxu0 %v643
        %683 = vmatmul.bf16.gmra.mxu0 %v591
        %v684 = vpop.f32.mrf.mxu0
        %v685 = vadd.f32 0.0, %v684
        %v686 = vpop.f32.mrf.mxu0
        %v687 = vadd.f32 0.0, %v686
        %688 = vmatmul.bf16.gmra.mxu0 %v592
        %v689 = vpop.f32.mrf.mxu0
        %v690 = vadd.f32 0.0, %v689
        %v691 = vpop.f32.mrf.mxu0
        %v692 = vadd.f32 0.0, %v691
        %693 = vdwg.mxu0
        %694 = vmatpush.bf16.msra.mxu0 %v658
        %695 = vmatpush.bf16.msra.mxu0 %v656
        %696 = vmatpush.bf16.msra.mxu0 %v654
        %697 = vmatpush.bf16.msra.mxu0 %v652
        %698 = vmatpush.bf16.msra.mxu0 %v650
        %699 = vmatpush.bf16.msra.mxu0 %v648
        %700 = vmatpush.bf16.msra.mxu0 %v646
        %701 = vmatpush.bf16.msra.mxu0 %v644
        %702 = vmatmul.bf16.gmra.mxu0 %v591
        %v703 = vpop.f32.mrf.mxu0
        %v704 = vadd.f32 0.0, %v703
        %v705 = vpop.f32.mrf.mxu0
        %v706 = vadd.f32 0.0, %v705
        %707 = vmatmul.bf16.gmra.mxu0 %v592
        %v708 = vpop.f32.mrf.mxu0
        %v709 = vadd.f32 0.0, %v708
        %v710 = vpop.f32.mrf.mxu0
        %v711 = vadd.f32 0.0, %v710
        %712 = vdwg.mxu0
        %v717 = vunpack.c.l.b16 %v557
        %v718 = vunpack.c.l.b16 %v558
        %v719 = vunpack.c.l.b16 %v559
        %v720 = vunpack.c.l.b16 %v560
        %v721 = vpack.c.b16 %v718, %v717
        %v722 = vpack.c.b16 %v720, %v719
        %725 = vmatpush.bf16.msra.mxu0 %v657
        %726 = vmatpush.bf16.msra.mxu0 %v655
        %727 = vmatpush.bf16.msra.mxu0 %v653
        %728 = vmatpush.bf16.msra.mxu0 %v651
        %729 = vmatpush.bf16.msra.mxu0 %v649
        %730 = vmatpush.bf16.msra.mxu0 %v647
        %731 = vmatpush.bf16.msra.mxu0 %v645
        %732 = vmatpush.bf16.msra.mxu0 %v643
        %733 = vmatmul.bf16.gmra.mxu0 %v721
        %v734 = vpop.f32.mrf.mxu0
        %v735 = vadd.f32 %v685, %v734
        %v736 = vpop.f32.mrf.mxu0
        %v737 = vadd.f32 %v687, %v736
        %738 = vmatmul.bf16.gmra.mxu0 %v722
        %v739 = vpop.f32.mrf.mxu0
        %v740 = vadd.f32 %v690, %v739
        %v741 = vpop.f32.mrf.mxu0
        %v742 = vadd.f32 %v692, %v741
        %743 = vdwg.mxu0
        %744 = vmatpush.bf16.msra.mxu0 %v658
        %745 = vmatpush.bf16.msra.mxu0 %v656
        %746 = vmatpush.bf16.msra.mxu0 %v654
        %747 = vmatpush.bf16.msra.mxu0 %v652
        %748 = vmatpush.bf16.msra.mxu0 %v650
        %749 = vmatpush.bf16.msra.mxu0 %v648
        %750 = vmatpush.bf16.msra.mxu0 %v646
        %751 = vmatpush.bf16.msra.mxu0 %v644
        %752 = vmatmul.bf16.gmra.mxu0 %v721
        %v753 = vpop.f32.mrf.mxu0
        %v754 = vadd.f32 %v704, %v753
        %v755 = vpop.f32.mrf.mxu0
        %v756 = vadd.f32 %v706, %v755
        %757 = vmatmul.bf16.gmra.mxu0 %v722
        %v758 = vpop.f32.mrf.mxu0
        %v759 = vadd.f32 %v709, %v758
        %v760 = vpop.f32.mrf.mxu0
        %v761 = vadd.f32 %v711, %v760
        %762 = vdwg.mxu0
        %763 = vmatpush.bf16.msra.mxu0 %v657
        %764 = vmatpush.bf16.msra.mxu0 %v655
        %765 = vmatpush.bf16.msra.mxu0 %v653
        %766 = vmatpush.bf16.msra.mxu0 %v651
        %767 = vmatpush.bf16.msra.mxu0 %v649
        %768 = vmatpush.bf16.msra.mxu0 %v647
        %769 = vmatpush.bf16.msra.mxu0 %v645
        %770 = vmatpush.bf16.msra.mxu0 %v643
        %771 = vmatmul.bf16.gmra.mxu0 %v581
        %v772 = vpop.f32.mrf.mxu0
        %v773 = vadd.f32 0.0, %v772
        %v774 = vpop.f32.mrf.mxu0
        %v775 = vadd.f32 0.0, %v774
        %776 = vmatmul.bf16.gmra.mxu0 %v582
        %v777 = vpop.f32.mrf.mxu0
        %v778 = vadd.f32 0.0, %v777
        %v779 = vpop.f32.mrf.mxu0
        %v780 = vadd.f32 0.0, %v779
        %781 = vdwg.mxu0
        %782 = vmatpush.bf16.msra.mxu0 %v658
        %783 = vmatpush.bf16.msra.mxu0 %v656
        %784 = vmatpush.bf16.msra.mxu0 %v654
        %785 = vmatpush.bf16.msra.mxu0 %v652
        %786 = vmatpush.bf16.msra.mxu0 %v650
        %787 = vmatpush.bf16.msra.mxu0 %v648
        %788 = vmatpush.bf16.msra.mxu0 %v646
        %789 = vmatpush.bf16.msra.mxu0 %v644
        %790 = vmatmul.bf16.gmra.mxu0 %v581
        %v791 = vpop.f32.mrf.mxu0
        %v792 = vadd.f32 0.0, %v791
        %v793 = vpop.f32.mrf.mxu0
        %v794 = vadd.f32 0.0, %v793
        %795 = vmatmul.bf16.gmra.mxu0 %v582
        %v796 = vpop.f32.mrf.mxu0
        %v797 = vadd.f32 0.0, %v796
        %v798 = vpop.f32.mrf.mxu0
        %v799 = vadd.f32 0.0, %v798
        %800 = vdwg.mxu0
        %v801 = vadd.f32 %v735, %v773
        %v802 = vadd.f32 %v754, %v792
        %v803 = vadd.f32 %v737, %v775
        %v804 = vadd.f32 %v756, %v794
        %v805 = vadd.f32 %v740, %v778
        %v806 = vadd.f32 %v759, %v797
        %v807 = vadd.f32 %v742, %v780
        %v808 = vadd.f32 %v761, %v799
        %v809 = vadd.f32 %v527, %v801
        %v810 = vadd.f32 %v528, %v802
        %v811 = vadd.f32 %v529, %v803
        %v812 = vadd.f32 %v530, %v804
        %v813 = vadd.f32 %v531, %v805
        %v814 = vadd.f32 %v532, %v806
        %v815 = vadd.f32 %v533, %v807
        %v816 = vadd.f32 %v534, %v808
        %817 = vst [vmem:[%s248] sm:$0xff] %v809
        %818 = vst [vmem:[%s248 + $0x8] sm:$0xff] %v810
        %819 = vst [vmem:[%s248 + $0x10] sm:$0xff] %v811
        %820 = vst [vmem:[%s248 + $0x18] sm:$0xff] %v812
        %821 = vst [vmem:[%s248 + $0x20] sm:$0xff] %v813
        %822 = vst [vmem:[%s248 + $0x28] sm:$0xff] %v814
        %823 = vst [vmem:[%s248 + $0x30] sm:$0xff] %v815
        %824 = vst [vmem:[%s248 + $0x38] sm:$0xff] %v816
        %s825 = sand.u32 %s108, 1
        %s826 = sand.u32 %s108, 1
        %s827 = smul.addr %s826, 64
        %s828 = scalar_lea.vmem [#allocation3], %s827
        // Predicated region
        $region67: #{depth_to_space.1} parent=61 // pred_check
          %p829 = pneg %p118
        $region68: #{depth_to_space.1} parent=61 // pred_check_branch
          %831 = sbr.rel (%p829) target = $region70
        $region69: #{depth_to_space.1} parent=61 // pred_region
          %s832 = smul.u32 %s20, 2
          %s833 = sadd.s32 %s832, %s22
          %s834 = smul.u32 2, %s21
          %s835 = smul.u32 2, %s833
          %s836 = smul.addr %s834, 8
          %s837 = sadd.s32 %s835, %s836
          %s838 = smul.addr %s19, 32
          %s839 = sadd.s32 %s837, %s838
          %s840 = smul.addr %s839, 8
          %s841 = scalar_lea.vmem %s2, %s840
          // Predicated region
          $region71: #{depth_to_space.1} parent=69 // pred_check
            _
          $region72: #{depth_to_space.1} parent=69 // pred_check_branch
            %843 = sbr.rel (0) target = $region74
          $region73: #{depth_to_space.1} parent=69 // pred_region
            // Predicated region
            $region75: #{depth_to_space.1} parent=73 // pred_check
              _
            $region76: #{depth_to_space.1} parent=73 // pred_check_branch
              %845 = sbr.rel (0) target = $region78
            $region77: #{depth_to_space.1} parent=73 // pred_region
              loop: start=0, step=1, limit=1
              $region79: #{depth_to_space.1} parent=77 // loop_pre_header
                _
              $region80: #{depth_to_space.1} parent=77 // loop_header
                %s847 = sphi 0, %s851
                %p848 = scmp.ge.s32.totalorder %s847, 1
                %s852 = sphi %s828, %s828
                %s853 = sphi %s841, %s841
              $region81: #{depth_to_space.1} parent=77 // loop_header_branch
                %850 = sbr.rel (%p848) target = $region85
              $region82: #{depth_to_space.1} parent=77 // loop_body
                %v854 = vld [vmem:[%s852] sm:$0xff]
                %855 = vst [vmem:[%s853] sm:$0xff] %v854
                %v856 = vld [vmem:[%s852 + $0x8] sm:$0xff]
                %857 = vst [vmem:[%s853 + $0x8] sm:$0xff] %v856
                %v858 = vld [vmem:[%s852 + $0x10] sm:$0xff]
                %859 = vst [vmem:[%s853 + $0x40] sm:$0xff] %v858
                %v860 = vld [vmem:[%s852 + $0x18] sm:$0xff]
                %861 = vst [vmem:[%s853 + $0x48] sm:$0xff] %v860
                %v862 = vld [vmem:[%s852 + $0x20] sm:$0xff]
                %863 = vst [vmem:[%s853 + $0x80] sm:$0xff] %v862
                %v864 = vld [vmem:[%s852 + $0x28] sm:$0xff]
                %865 = vst [vmem:[%s853 + $0x88] sm:$0xff] %v864
                %v866 = vld [vmem:[%s852 + $0x30] sm:$0xff]
                %867 = vst [vmem:[%s853 + $0xc0] sm:$0xff] %v866
                %v868 = vld [vmem:[%s852 + $0x38] sm:$0xff]
                %869 = vst [vmem:[%s853 + $0xc8] sm:$0xff] %v868
              $region83: #{depth_to_space.1} parent=77 // loop_footer
                %s851 = sadd.s32 1, %s847
              $region84: #{depth_to_space.1} parent=77 // loop_footer_branch
                %846 = sbr.rel target = $region80
              $region85: #{depth_to_space.1} parent=77 // loop_exit
                _
            $region78: #{depth_to_space.1} parent=73 // pred_fallthru
              _
            // Predicated region
            $region86: #{depth_to_space.1} parent=73 // pred_check
              _
            $region87: #{depth_to_space.1} parent=73 // pred_check_branch
              %871 = sbr.rel target = $region89
            $region88: #{depth_to_space.1} parent=73 // pred_region
              _
            $region89: #{depth_to_space.1} parent=73 // pred_fallthru
              _
          $region74: #{depth_to_space.1} parent=69 // pred_fallthru
            _
          %872 = vnop
        $region70: #{depth_to_space.1} parent=61 // pred_fallthru
          _
      $region62: #{depth_to_space.1} parent=5 // pred_fallthru
        _
      %p873 = scmp.le.s32.totalorder 2, %s8
      // Predicated region
      $region90: #{depth_to_space.1} parent=5 // pred_check
        %p874 = pneg %p873
      $region91: #{depth_to_space.1} parent=5 // pred_check_branch
        %876 = sbr.rel (%p874) target = $region93
      $region92: #{depth_to_space.1} parent=5 // pred_region
        %s877 = ssub.s32 %s8, 2
        // Predicated region
        $region94: #{depth_to_space.1} parent=92 // pred_check
          %p878 = pneg %p124
        $region95: #{depth_to_space.1} parent=92 // pred_check_branch
          %880 = sbr.rel (%p878) target = $region97
        $region96: #{depth_to_space.1} parent=92 // pred_region
          %s881 = sand.u32 %s109, 1
          %s882 = sand.u32 %s109, 1
          %s883 = smul.addr %s882, 64
          %s884 = scalar_lea.vmem [#allocation3], %s883
        $region97: #{depth_to_space.1} parent=92 // pred_fallthru
          _
      $region93: #{depth_to_space.1} parent=5 // pred_fallthru
        _
    $region6: #{depth_to_space.1} parent=1 // loop_footer
      %s12 = sadd.s32 1, %s8
    $region7: #{depth_to_space.1} parent=1 // loop_footer_branch
      %7 = sbr.rel target = $region3
    $region8: #{depth_to_space.1} parent=1 // loop_exit
      _

</llo_original>
